<compile_context>
chip_gen: v5e
topology: v5e:2x2
jax: 0.10.0
libtpu: 0.0.40
codegen_flags: <defaults>
</compile_context>

<pallas_src>
import jax
import jax.numpy as jnp
from jax import lax
from jax.experimental import pallas as pl
from jax.experimental.pallas import tpu as pltpu


def _make_kernel(n_ctx, seq_len):
    def kernel(ctx_ref, sig_ref, ba_ref, loc_ref, emb_ref,
               p_ref, ps_ref, pba_ref, ploc_ref):
        i = pl.program_id(0)                            # which of the N shared contexts
        pos = lax.broadcasted_iota(jnp.int32, (seq_len, 1), 0)
        win = (pos >= 1) & (pos < 1 + n_ctx)            # context-window mask (seq, 1)
        for out_ref, mid_ref in ((p_ref, ctx_ref), (ps_ref, sig_ref),
                                 (pba_ref, ba_ref), (ploc_ref, loc_ref)):
            # One dense, aligned store per output: blend the (zero-padded) mid
            # into the context window, copy the embedding everywhere else.
            out_ref[...] = jnp.where(win, mid_ref[i], emb_ref[...])
    return kernel


def _vmem_budget_bytes():
    """Per-generation VMEM sizing -> (tile budget, compiler vmem limit)."""
    try:
        cap = int(pltpu.get_tpu_info().vmem_capacity_bytes)
    except Exception:
        cap = 64 << 20                                  # conservative fallback (v7x-sized)
    limit = max(cap // 2, 32 << 20)                     # 64 MiB on 128-MiB parts, 32 MiB on v7x
    budget = max(limit - (8 << 20), 16 << 20)           # headroom for sems / compiler scratch
    return budget, limit


def _choose_rows_per_step(n_cls, row_bytes, resident_bytes, budget_bytes, cap=None):
    """Largest class-chunk whose working set fits the VMEM budget.

    Working set per step: 5 streamed arrays (4 outputs + embedding input),
    double buffered, plus the resident constant-index mid blocks. No
    divisibility requirement: the final chunk may be ragged."""
    avail = budget_bytes - resident_bytes
    tj = max(1, avail // (10 * row_bytes))
    tj = min(tj, n_cls)
    if cap is not None:
        tj = min(tj, max(1, cap))
    return int(tj)


def prompt_learner_forward(B, A, sigma, ctx_local, embedding, n_cls,
                           max_rows_per_step=None):
    """Pallas implementation of PromptLearner.forward (class_token_position='end')."""
    N, n_ctx, _bottleneck = B.shape
    ctx_dim = A.shape[-1]
    rows, seq_len, _ = embedding.shape
    assert rows == N * n_cls
    assert seq_len >= 1 + n_ctx
    emb_dtype = embedding.dtype
    itemsize = jnp.dtype(emb_dtype).itemsize

    # Hoisted out of the per-class loop: the tiny low-rank matmul is identical
    # for all n_cls classes.
    ba = jnp.einsum('nkb,nbd->nkd', B, A)
    ctx = ba + sigma

    # Zero-pad each (N, n_ctx, d) mid to full sequence length so the kernel can
    # splice it with a single aligned select/store; cast to the embedding dtype
    # (matches the dtype of torch.cat in the reference module).
    def pad_mid(x):
        x = x.astype(emb_dtype)
        return jnp.pad(x, ((0, 0), (1, seq_len - 1 - n_ctx), (0, 0)))

    ctx_m, sig_m, ba_m, loc_m = (pad_mid(x) for x in (ctx, sigma, ba, ctx_local))

    # Free 4-D view: row r = i*n_cls + c  <->  [i, c], matching
    # permute(1, 0, 2, 3).view(N*n_cls, ...) in the PyTorch code.
    emb4 = embedding.reshape(N, n_cls, seq_len, ctx_dim)

    row_bytes = seq_len * ctx_dim * itemsize
    resident = 4 * 2 * N * seq_len * ctx_dim * itemsize        # 4 mids, double-buffered
    budget, vmem_limit = _vmem_budget_bytes()
    tj = _choose_rows_per_step(n_cls, row_bytes, resident, budget, max_rows_per_step)
    nj = pl.cdiv(n_cls, tj)

    # Grid: N outermost, class chunks innermost -> consecutive steps write
    # contiguous row blocks of every output, and the constant-index mid blocks
    # are never re-fetched.
    mid_spec = pl.BlockSpec((N, seq_len, ctx_dim), lambda i, j: (0, 0, 0))
    row_spec = pl.BlockSpec((None, tj, seq_len, ctx_dim), lambda i, j: (i, j, 0, 0))

    out_sds = jax.ShapeDtypeStruct((N, n_cls, seq_len, ctx_dim), emb_dtype)
    stream_bytes = (5 * rows * seq_len * ctx_dim + 4 * N * seq_len * ctx_dim) * itemsize
    cost = pl.CostEstimate(flops=0, transcendentals=0, bytes_accessed=int(stream_bytes))

    kernel = _make_kernel(n_ctx, seq_len)
    outs4 = pl.pallas_call(
        kernel,
        out_shape=(out_sds, out_sds, out_sds, out_sds),
        grid_spec=pltpu.PrefetchScalarGridSpec(
            num_scalar_prefetch=0,
            grid=(N, nj),
            in_specs=[mid_spec, mid_spec, mid_spec, mid_spec,   # ctx, sigma, BA, local
                      row_spec],                                # embedding
            out_specs=[row_spec, row_spec, row_spec, row_spec],
        ),
        compiler_params=pltpu.CompilerParams(
            # NOTE: on v7x (2 TCs/chip) the class-chunk axis could additionally be
            # marked pltpu.CORE_PARALLEL to split the streaming across both cores.
            dimension_semantics=("parallel", "parallel"),
            vmem_limit_bytes=int(vmem_limit)),
        cost_estimate=cost,
    )(ctx_m, sig_m, ba_m, loc_m, emb4)

    prompts, prompts_sigma, prompts_BA, prompts_local = (
        o.reshape(rows, seq_len, ctx_dim) for o in outs4)
    # Return order matches the PyTorch module.
    return embedding, prompts_sigma, prompts_BA, prompts, prompts_local


def _reference_forward(B, A, sigma, ctx_local, embedding, n_cls):
    """Plain-JAX reference mirroring the PyTorch forward for verification."""
    N, n_ctx, _ = B.shape
    ctx_dim = A.shape[-1]
    ba = jnp.einsum('nkb,nbd->nkd', B, A)
    ctx = ba + sigma

    def expand(x):
        x = jnp.broadcast_to(x[None], (n_cls, N, n_ctx, ctx_dim))
        x = jnp.transpose(x, (1, 0, 2, 3)).reshape(N * n_cls, n_ctx, ctx_dim)
        return x.astype(embedding.dtype)

    prefix = embedding[:, :1, :]
    suffix = embedding[:, 1 + n_ctx:, :]
    cat = lambda mid: jnp.concatenate([prefix, expand(mid), suffix], axis=1)
    return embedding, cat(sigma), cat(ba), cat(ctx), cat(ctx_local)


if __name__ == "__main__":
    # Small synthetic shapes consistent with the module's __init__:
    #   N=2 shared contexts, n_cls=6 classes, n_ctx=4 context tokens,
    #   bottleneck=8, ctx_dim=128 (lane-friendly), seq_len=16 (stand-in for 77).
    N, n_cls, n_ctx, bottleneck, ctx_dim, seq_len = 2, 6, 4, 8, 128, 16

    key = jax.random.PRNGKey(0)
    kB, kA, kS, kL, kE = jax.random.split(key, 5)
    B_p       = 0.02 * jax.random.normal(kB, (N, n_ctx, bottleneck), jnp.float32)
    A_p       = 0.02 * jax.random.normal(kA, (N, bottleneck, ctx_dim), jnp.float32)
    sigma_p   = 0.02 * jax.random.normal(kS, (N, n_ctx, ctx_dim), jnp.float32)
    ctx_local = 0.02 * jax.random.normal(kL, (N, n_ctx, ctx_dim), jnp.float32)
    embedding = 0.02 * jax.random.normal(kE, (N * n_cls, seq_len, ctx_dim), jnp.float32)

    refs = _reference_forward(B_p, A_p, sigma_p, ctx_local, embedding, n_cls)

    # Three tilings: auto (whole class axis in one block), an evenly dividing
    # multi-chunk split, and a non-dividing split exercising the ragged final
    # class chunk (the previous revision collapsed to 1-row steps here).
    for max_rows in (None, 3, 4):
        outs = prompt_learner_forward(B_p, A_p, sigma_p, ctx_local, embedding,
                                      n_cls, max_rows_per_step=max_rows)
        outs = jax.block_until_ready(outs)
        for got, want in zip(outs, refs):
            assert got.shape == want.shape and got.dtype == want.dtype
            assert jnp.allclose(got, want, atol=1e-5, rtol=1e-5)

    # TODO(synk): 'middle'/'front' class_token_position branches use per-class
    # ragged name_lens; only the 'end' branch (the path that returns all five
    # outputs in the reference code) is implemented here.
    print("KERNEL_OK")
</pallas_src>

<mosaic_0001>
module attributes {stable_mosaic.version = 11 : i64} {
  func.func @kernel(%arg0: i32, %arg1: i32, %arg2: memref<2x16x128xf32, #tpu.memory_space<vmem>>, %arg3: memref<2x16x128xf32, #tpu.memory_space<vmem>>, %arg4: memref<2x16x128xf32, #tpu.memory_space<vmem>>, %arg5: memref<2x16x128xf32, #tpu.memory_space<vmem>>, %arg6: memref<1x6x16x128xf32, #tpu.memory_space<vmem>>, %arg7: memref<1x6x16x128xf32, #tpu.memory_space<vmem>>, %arg8: memref<1x6x16x128xf32, #tpu.memory_space<vmem>>, %arg9: memref<1x6x16x128xf32, #tpu.memory_space<vmem>>, %arg10: memref<1x6x16x128xf32, #tpu.memory_space<vmem>>) attributes {dimension_semantics = [#tpu.dimension_semantics<parallel>, #tpu.dimension_semantics<parallel>], iteration_bounds = array<i64: 2, 1>, scalar_prefetch = 0 : i64, scratch_operands = 0 : i64, tpu.core_type = #tpu.core_type<tc>, window_params = [{pipeline_mode = #tpu.pipeline_mode<synchronous>, transform_indices = @transform_0, window_bounds = array<i64: 2, 16, 128>}, {pipeline_mode = #tpu.pipeline_mode<synchronous>, transform_indices = @transform_1, window_bounds = array<i64: 2, 16, 128>}, {pipeline_mode = #tpu.pipeline_mode<synchronous>, transform_indices = @transform_2, window_bounds = array<i64: 2, 16, 128>}, {pipeline_mode = #tpu.pipeline_mode<synchronous>, transform_indices = @transform_3, window_bounds = array<i64: 2, 16, 128>}, {transform_indices = @transform_4, window_bounds = array<i64: 1, 6, 16, 128>}, {transform_indices = @transform_5, window_bounds = array<i64: 1, 6, 16, 128>}, {transform_indices = @transform_6, window_bounds = array<i64: 1, 6, 16, 128>}, {transform_indices = @transform_7, window_bounds = array<i64: 1, 6, 16, 128>}, {transform_indices = @transform_8, window_bounds = array<i64: 1, 6, 16, 128>}]} {
    %0 = tpu.iota {dimensions = array<i32: 0>} : vector<16x1xi32>
    %c1_i32 = arith.constant 1 : i32
    %1 = vector.broadcast %c1_i32 : i32 to vector<16x1xi32>
    %2 = arith.cmpi sge, %0, %1 : vector<16x1xi32>
    %c5_i32 = arith.constant 5 : i32
    %3 = vector.broadcast %c5_i32 : i32 to vector<16x1xi32>
    %4 = arith.cmpi slt, %0, %3 : vector<16x1xi32>
    %5 = arith.andi %2, %4 : vector<16x1xi1>
    %6 = arith.index_cast %arg0 : i32 to index
    %c0 = arith.constant 0 : index
    %c0_0 = arith.constant 0 : index
    %7 = vector.load %arg2[%6, %c0, %c0_0] : memref<2x16x128xf32, #tpu.memory_space<vmem>>, vector<1x16x128xf32>
    %8 = vector.shape_cast %7 : vector<1x16x128xf32> to vector<16x128xf32>
    %c0_1 = arith.constant 0 : index
    %c0_2 = arith.constant 0 : index
    %c0_3 = arith.constant 0 : index
    %c0_4 = arith.constant 0 : index
    %9 = vector.load %arg6[%c0_1, %c0_2, %c0_3, %c0_4] : memref<1x6x16x128xf32, #tpu.memory_space<vmem>>, vector<1x6x16x128xf32>
    %10 = vector.shape_cast %9 : vector<1x6x16x128xf32> to vector<6x16x128xf32>
    %11 = vector.shape_cast %5 : vector<16x1xi1> to vector<1x16x1xi1>
    %12 = vector.broadcast %11 : vector<1x16x1xi1> to vector<6x16x128xi1>
    %13 = vector.shape_cast %8 : vector<16x128xf32> to vector<1x16x128xf32>
    %14 = vector.broadcast %13 : vector<1x16x128xf32> to vector<6x16x128xf32>
    %15 = arith.select %12, %14, %10 : vector<6x16x128xi1>, vector<6x16x128xf32>
    %c0_5 = arith.constant 0 : index
    %c0_6 = arith.constant 0 : index
    %c0_7 = arith.constant 0 : index
    %c0_8 = arith.constant 0 : index
    %16 = vector.load %arg7[%c0_5, %c0_6, %c0_7, %c0_8] : memref<1x6x16x128xf32, #tpu.memory_space<vmem>>, vector<1x6x16x128xf32>
    %17 = vector.shape_cast %16 : vector<1x6x16x128xf32> to vector<6x16x128xf32>
    %18 = vector.shape_cast %15 : vector<6x16x128xf32> to vector<1x6x16x128xf32>
    tpu.vector_store %arg7[%c0_5, %c0_6, %c0_7, %c0_8], %18 {strides = array<i32>} : memref<1x6x16x128xf32, #tpu.memory_space<vmem>>, vector<1x6x16x128xf32>,
    %19 = arith.index_cast %arg0 : i32 to index
    %c0_9 = arith.constant 0 : index
    %c0_10 = arith.constant 0 : index
    %20 = vector.load %arg3[%19, %c0_9, %c0_10] : memref<2x16x128xf32, #tpu.memory_space<vmem>>, vector<1x16x128xf32>
    %21 = vector.shape_cast %20 : vector<1x16x128xf32> to vector<16x128xf32>
    %c0_11 = arith.constant 0 : index
    %c0_12 = arith.constant 0 : index
    %c0_13 = arith.constant 0 : index
    %c0_14 = arith.constant 0 : index
    %22 = vector.load %arg6[%c0_11, %c0_12, %c0_13, %c0_14] : memref<1x6x16x128xf32, #tpu.memory_space<vmem>>, vector<1x6x16x128xf32>
    %23 = vector.shape_cast %22 : vector<1x6x16x128xf32> to vector<6x16x128xf32>
    %24 = vector.shape_cast %5 : vector<16x1xi1> to vector<1x16x1xi1>
    %25 = vector.broadcast %24 : vector<1x16x1xi1> to vector<6x16x128xi1>
    %26 = vector.shape_cast %21 : vector<16x128xf32> to vector<1x16x128xf32>
    %27 = vector.broadcast %26 : vector<1x16x128xf32> to vector<6x16x128xf32>
    %28 = arith.select %25, %27, %23 : vector<6x16x128xi1>, vector<6x16x128xf32>
    %c0_15 = arith.constant 0 : index
    %c0_16 = arith.constant 0 : index
    %c0_17 = arith.constant 0 : index
    %c0_18 = arith.constant 0 : index
    %29 = vector.load %arg8[%c0_15, %c0_16, %c0_17, %c0_18] : memref<1x6x16x128xf32, #tpu.memory_space<vmem>>, vector<1x6x16x128xf32>
    %30 = vector.shape_cast %29 : vector<1x6x16x128xf32> to vector<6x16x128xf32>
    %31 = vector.shape_cast %28 : vector<6x16x128xf32> to vector<1x6x16x128xf32>
    tpu.vector_store %arg8[%c0_15, %c0_16, %c0_17, %c0_18], %31 {strides = array<i32>} : memref<1x6x16x128xf32, #tpu.memory_space<vmem>>, vector<1x6x16x128xf32>,
    %32 = arith.index_cast %arg0 : i32 to index
    %c0_19 = arith.constant 0 : index
    %c0_20 = arith.constant 0 : index
    %33 = vector.load %arg4[%32, %c0_19, %c0_20] : memref<2x16x128xf32, #tpu.memory_space<vmem>>, vector<1x16x128xf32>
    %34 = vector.shape_cast %33 : vector<1x16x128xf32> to vector<16x128xf32>
    %c0_21 = arith.constant 0 : index
    %c0_22 = arith.constant 0 : index
    %c0_23 = arith.constant 0 : index
    %c0_24 = arith.constant 0 : index
    %35 = vector.load %arg6[%c0_21, %c0_22, %c0_23, %c0_24] : memref<1x6x16x128xf32, #tpu.memory_space<vmem>>, vector<1x6x16x128xf32>
    %36 = vector.shape_cast %35 : vector<1x6x16x128xf32> to vector<6x16x128xf32>
    %37 = vector.shape_cast %5 : vector<16x1xi1> to vector<1x16x1xi1>
    %38 = vector.broadcast %37 : vector<1x16x1xi1> to vector<6x16x128xi1>
    %39 = vector.shape_cast %34 : vector<16x128xf32> to vector<1x16x128xf32>
    %40 = vector.broadcast %39 : vector<1x16x128xf32> to vector<6x16x128xf32>
    %41 = arith.select %38, %40, %36 : vector<6x16x128xi1>, vector<6x16x128xf32>
    %c0_25 = arith.constant 0 : index
    %c0_26 = arith.constant 0 : index
    %c0_27 = arith.constant 0 : index
    %c0_28 = arith.constant 0 : index
    %42 = vector.load %arg9[%c0_25, %c0_26, %c0_27, %c0_28] : memref<1x6x16x128xf32, #tpu.memory_space<vmem>>, vector<1x6x16x128xf32>
    %43 = vector.shape_cast %42 : vector<1x6x16x128xf32> to vector<6x16x128xf32>
    %44 = vector.shape_cast %41 : vector<6x16x128xf32> to vector<1x6x16x128xf32>
    tpu.vector_store %arg9[%c0_25, %c0_26, %c0_27, %c0_28], %44 {strides = array<i32>} : memref<1x6x16x128xf32, #tpu.memory_space<vmem>>, vector<1x6x16x128xf32>,
    %45 = arith.index_cast %arg0 : i32 to index
    %c0_29 = arith.constant 0 : index
    %c0_30 = arith.constant 0 : index
    %46 = vector.load %arg5[%45, %c0_29, %c0_30] : memref<2x16x128xf32, #tpu.memory_space<vmem>>, vector<1x16x128xf32>
    %47 = vector.shape_cast %46 : vector<1x16x128xf32> to vector<16x128xf32>
    %c0_31 = arith.constant 0 : index
    %c0_32 = arith.constant 0 : index
    %c0_33 = arith.constant 0 : index
    %c0_34 = arith.constant 0 : index
    %48 = vector.load %arg6[%c0_31, %c0_32, %c0_33, %c0_34] : memref<1x6x16x128xf32, #tpu.memory_space<vmem>>, vector<1x6x16x128xf32>
    %49 = vector.shape_cast %48 : vector<1x6x16x128xf32> to vector<6x16x128xf32>
    %50 = vector.shape_cast %5 : vector<16x1xi1> to vector<1x16x1xi1>
    %51 = vector.broadcast %50 : vector<1x16x1xi1> to vector<6x16x128xi1>
    %52 = vector.shape_cast %47 : vector<16x128xf32> to vector<1x16x128xf32>
    %53 = vector.broadcast %52 : vector<1x16x128xf32> to vector<6x16x128xf32>
    %54 = arith.select %51, %53, %49 : vector<6x16x128xi1>, vector<6x16x128xf32>
    %c0_35 = arith.constant 0 : index
    %c0_36 = arith.constant 0 : index
    %c0_37 = arith.constant 0 : index
    %c0_38 = arith.constant 0 : index
    %55 = vector.load %arg10[%c0_35, %c0_36, %c0_37, %c0_38] : memref<1x6x16x128xf32, #tpu.memory_space<vmem>>, vector<1x6x16x128xf32>
    %56 = vector.shape_cast %55 : vector<1x6x16x128xf32> to vector<6x16x128xf32>
    %57 = vector.shape_cast %54 : vector<6x16x128xf32> to vector<1x6x16x128xf32>
    tpu.vector_store %arg10[%c0_35, %c0_36, %c0_37, %c0_38], %57 {strides = array<i32>} : memref<1x6x16x128xf32, #tpu.memory_space<vmem>>, vector<1x6x16x128xf32>,
    return
  }
  func.func @transform_0(%arg0: i32, %arg1: i32) -> (i32, i32, i32) {
    %c0_i32 = arith.constant 0 : i32
    %c0_i32_0 = arith.constant 0 : i32
    %c0_i32_1 = arith.constant 0 : i32
    %c0_i32_2 = arith.constant 0 : i32
    return %c0_i32, %c0_i32_0, %c0_i32_1 : i32, i32, i32
  }
  func.func @transform_1(%arg0: i32, %arg1: i32) -> (i32, i32, i32) {
    %c0_i32 = arith.constant 0 : i32
    %c0_i32_0 = arith.constant 0 : i32
    %c0_i32_1 = arith.constant 0 : i32
    %c0_i32_2 = arith.constant 0 : i32
    return %c0_i32, %c0_i32_0, %c0_i32_1 : i32, i32, i32
  }
  func.func @transform_2(%arg0: i32, %arg1: i32) -> (i32, i32, i32) {
    %c0_i32 = arith.constant 0 : i32
    %c0_i32_0 = arith.constant 0 : i32
    %c0_i32_1 = arith.constant 0 : i32
    %c0_i32_2 = arith.constant 0 : i32
    return %c0_i32, %c0_i32_0, %c0_i32_1 : i32, i32, i32
  }
  func.func @transform_3(%arg0: i32, %arg1: i32) -> (i32, i32, i32) {
    %c0_i32 = arith.constant 0 : i32
    %c0_i32_0 = arith.constant 0 : i32
    %c0_i32_1 = arith.constant 0 : i32
    %c0_i32_2 = arith.constant 0 : i32
    return %c0_i32, %c0_i32_0, %c0_i32_1 : i32, i32, i32
  }
  func.func @transform_4(%arg0: i32, %arg1: i32) -> (i32, i32, i32, i32) {
    %c0_i32 = arith.constant 0 : i32
    %c0_i32_0 = arith.constant 0 : i32
    %c0_i32_1 = arith.constant 0 : i32
    return %arg0, %arg1, %c0_i32, %c0_i32_0 : i32, i32, i32, i32
  }
  func.func @transform_5(%arg0: i32, %arg1: i32) -> (i32, i32, i32, i32) {
    %c0_i32 = arith.constant 0 : i32
    %c0_i32_0 = arith.constant 0 : i32
    %c0_i32_1 = arith.constant 0 : i32
    return %arg0, %arg1, %c0_i32, %c0_i32_0 : i32, i32, i32, i32
  }
  func.func @transform_6(%arg0: i32, %arg1: i32) -> (i32, i32, i32, i32) {
    %c0_i32 = arith.constant 0 : i32
    %c0_i32_0 = arith.constant 0 : i32
    %c0_i32_1 = arith.constant 0 : i32
    return %arg0, %arg1, %c0_i32, %c0_i32_0 : i32, i32, i32, i32
  }
  func.func @transform_7(%arg0: i32, %arg1: i32) -> (i32, i32, i32, i32) {
    %c0_i32 = arith.constant 0 : i32
    %c0_i32_0 = arith.constant 0 : i32
    %c0_i32_1 = arith.constant 0 : i32
    return %arg0, %arg1, %c0_i32, %c0_i32_0 : i32, i32, i32, i32
  }
  func.func @transform_8(%arg0: i32, %arg1: i32) -> (i32, i32, i32, i32) {
    %c0_i32 = arith.constant 0 : i32
    %c0_i32_0 = arith.constant 0 : i32
    %c0_i32_1 = arith.constant 0 : i32
    return %arg0, %arg1, %c0_i32, %c0_i32_0 : i32, i32, i32, i32
  }
}

</mosaic_0001>

<llo_original>
// kernel: tpu_custom_call.1
$region0: #{tpu_custom_call.1}
  #allocation0 [shape = 'u32[]', space=smem, size = 0x4, offset = 0x4, fixed_abs, tag = 'smem constant byte address 0x4 - core index']
  #allocation1 [shape = 'u32[72,128]{1,0:T(1,128)}', space=vmem, size = 0x9000, scoped, tag = 'internal scratch']
  %s0 = inlined_call_operand.hbm [shape: f32[2,16,128], index: 0, kind: input, shape index: {}]
  %s1 = inlined_call_operand.hbm [shape: f32[2,16,128], index: 1, kind: input, shape index: {}]
  %s2 = inlined_call_operand.hbm [shape: f32[2,16,128], index: 2, kind: input, shape index: {}]
  %s3 = inlined_call_operand.hbm [shape: f32[2,16,128], index: 3, kind: input, shape index: {}]
  %s4 = inlined_call_operand.hbm [shape: f32[2,6,16,128], index: 4, kind: input, shape index: {}]
  %s5 = inlined_call_operand.hbm [shape: f32[2,6,16,128], index: 5, kind: output, shape index: {0}]
  %s6 = inlined_call_operand.hbm [shape: f32[2,6,16,128], index: 6, kind: output, shape index: {1}]
  %s7 = inlined_call_operand.hbm [shape: f32[2,6,16,128], index: 7, kind: output, shape index: {2}]
  %s8 = inlined_call_operand.hbm [shape: f32[2,6,16,128], index: 8, kind: output, shape index: {3}]
  %9 = xla_tuple %s5, %s6, %s7, %s8
  %s10 = sld [smem:[#allocation0]]
  $region97: #{tpu_custom_call.1} parent=0
    _
  %s12 = ssub.s32 1, %s10
  %s13 = scalar_select 0, %s12, %s10
  $region1: #{tpu_custom_call.1} parent=0
    #allocation2 [shape = 'u8[16384]{0}', space=vmem, size = 0x4000, scoped, tag = 'input window, operand 0, single buffered']
    #allocation3 [shape = 's32[2]{0}', space=sflag, size = 0x8, scoped, tag = 'scoped memory for tpu_custom_call.1']
    #allocation4 [shape = 's32[2]{0}', space=sflag, size = 0x8, scoped, tag = 'scoped memory for tpu_custom_call.1']
    #allocation5 [shape = 'u8[16384]{0}', space=vmem, size = 0x4000, scoped, tag = 'input window, operand 1, single buffered']
    #allocation6 [shape = 's32[1]{0}', space=sflag, size = 0x4, scoped, tag = 'scoped memory for tpu_custom_call.1']
    #allocation7 [shape = 'u8[16384]{0}', space=vmem, size = 0x4000, scoped, tag = 'input window, operand 2, single buffered']
    #allocation8 [shape = 'u8[16384]{0}', space=vmem, size = 0x4000, scoped, tag = 'input window, operand 3, single buffered']
    #allocation9 [shape = 's32[1]{0}', space=sflag, size = 0x4, scoped, tag = 'scoped memory for tpu_custom_call.1']
    #allocation10 [shape = 'u8[98304]{0}', space=vmem, size = 0x18000, scoped, tag = 'input window, operand 4']
    #allocation11 [shape = 'u8[98304]{0}', space=vmem, size = 0x18000, scoped, tag = 'output window, operand 0']
    #allocation12 [shape = 'u8[98304]{0}', space=vmem, size = 0x18000, scoped, tag = 'output window, operand 1']
    #allocation13 [shape = 's32[2]{0}', space=sflag, size = 0x8, scoped, tag = 'scoped memory for tpu_custom_call.1']
    #allocation14 [shape = 'u8[98304]{0}', space=vmem, size = 0x18000, scoped, tag = 'output window, operand 2']
    #allocation15 [shape = 'u8[98304]{0}', space=vmem, size = 0x18000, scoped, tag = 'output window, operand 3']
    #allocation16 [shape = 's32[2]{0}', space=sflag, size = 0x8, scoped, tag = 'scoped memory for tpu_custom_call.1']
    %14 = vsyncpa [#allocation3], 0
    %15 = vsyncpa [#allocation6], 0
    %16 = vsyncpa [#allocation9], 0
    %17 = vsyncpa [#allocation4], 0
    %s18 = scalar_lea.sflag [#allocation4], 1
    %19 = vsyncpa %s18, 0
    %20 = vsyncpa [#allocation13], 0
    %s21 = scalar_lea.sflag [#allocation13], 1
    %22 = vsyncpa %s21, 0
    %23 = vsyncpa [#allocation16], 0
    %s24 = scalar_lea.sflag [#allocation16], 1
    %25 = vsyncpa %s24, 0
    loop: start=0, step=1, limit=4
    $region2: #{tpu_custom_call.1} parent=1 // loop_pre_header
      _
    $region3: #{tpu_custom_call.1} parent=1 // loop_header
      %s27 = sphi 0, %s31
      %p28 = scmp.ge.s32.totalorder %s27, 4
      %s34 = sphi 0, %s46
      %s35 = sphi 0, %s42
      %s36 = sphi 0, %s34
      %s37 = sphi 0, %s35
      %s38 = sphi 0, %s36
      %s39 = sphi 0, %s37
      %s47 = sphi 0, %s47
      %s49 = sphi 0, %s47
      %s50 = sphi 0, %s49
      %s64 = sphi 0, %s50
      %s68 = sphi 0, %s68
      %s70 = sphi 0, %s68
      %s71 = sphi 0, %s70
      %s85 = sphi 0, %s71
      %s89 = sphi 0, %s89
      %s91 = sphi 0, %s89
      %s92 = sphi 0, %s91
      %s106 = sphi 0, %s92
      %s110 = sphi 0, %s110
      %s112 = sphi 0, %s110
      %s113 = sphi 0, %s112
      %s127 = sphi 0, %s113
      %s135 = sphi 0, %s137
      %s138 = sphi 0, %s135
      %s139 = sphi 0, %s138
      %s155 = sphi 0, %s139
      %s163 = sphi 0, %s165
      %s166 = sphi 0, %s163
      %s167 = sphi 0, %s166
      %s183 = sphi 0, %s167
      %s191 = sphi 0, %s193
      %s194 = sphi 0, %s191
      %s195 = sphi 0, %s194
      %s211 = sphi 0, %s195
      %s219 = sphi 0, %s221
      %s222 = sphi 0, %s219
      %s223 = sphi 0, %s222
      %s239 = sphi 0, %s223
      %s247 = sphi 0, %s249
      %s250 = sphi 0, %s247
      %s251 = sphi 0, %s250
      %s267 = sphi 0, %s251
    $region4: #{tpu_custom_call.1} parent=1 // loop_header_branch
      %30 = sbr.rel (%p28) target = $region8
    $region5: #{tpu_custom_call.1} parent=1 // loop_body
      %s32 = ssub.s32 %s27, 1
      %s33 = ssub.s32 %s27, 2
      %s40 = sadd.s32 1, %s35
      %p41 = scmp.ge.s32.totalorder %s40, 1
      %s42 = scalar_select %p41, 0, %s40
      %s43 = sadd.s32 1, %s34
      %s44 = scalar_select %p41, %s43, %s34
      %p45 = scmp.ge.s32.totalorder %s44, 2
      %s46 = scalar_select %p45, 0, %s44
      %s48 = sadd.s32 %s47, 1
      %p51 = scmp.eq.s32.totalorder %s27, 1
      %p52 = scmp.ne.s32.totalorder %s47, %s49
      %p53 = scmp.eq.s32.totalorder %s27, 0
      %p54 = por %p52, %p53
      %p55 = scmp.ne.s32.totalorder %s47, %s49
      %p56 = scmp.eq.s32.totalorder %s32, 1
      %p57 = por %p55, %p56
      %p58 = scmp.ne.s32.totalorder %s49, %s50
      %p59 = scmp.eq.s32.totalorder %s32, 0
      %p60 = por %p58, %p59
      %p61 = scmp.ne.s32.totalorder %s49, %s50
      %p62 = scmp.eq.s32.totalorder %s33, 1
      %p63 = por %p61, %p62
      %p65 = scmp.ne.s32.totalorder %s50, %s64
      %p66 = scmp.eq.s32.totalorder %s33, 0
      %p67 = por %p65, %p66
      %s69 = sadd.s32 %s68, 1
      %p72 = scmp.eq.s32.totalorder %s27, 1
      %p73 = scmp.ne.s32.totalorder %s68, %s70
      %p74 = scmp.eq.s32.totalorder %s27, 0
      %p75 = por %p73, %p74
      %p76 = scmp.ne.s32.totalorder %s68, %s70
      %p77 = scmp.eq.s32.totalorder %s32, 1
      %p78 = por %p76, %p77
      %p79 = scmp.ne.s32.totalorder %s70, %s71
      %p80 = scmp.eq.s32.totalorder %s32, 0
      %p81 = por %p79, %p80
      %p82 = scmp.ne.s32.totalorder %s70, %s71
      %p83 = scmp.eq.s32.totalorder %s33, 1
      %p84 = por %p82, %p83
      %p86 = scmp.ne.s32.totalorder %s71, %s85
      %p87 = scmp.eq.s32.totalorder %s33, 0
      %p88 = por %p86, %p87
      %s90 = sadd.s32 %s89, 1
      %p93 = scmp.eq.s32.totalorder %s27, 1
      %p94 = scmp.ne.s32.totalorder %s89, %s91
      %p95 = scmp.eq.s32.totalorder %s27, 0
      %p96 = por %p94, %p95
      %p97 = scmp.ne.s32.totalorder %s89, %s91
      %p98 = scmp.eq.s32.totalorder %s32, 1
      %p99 = por %p97, %p98
      %p100 = scmp.ne.s32.totalorder %s91, %s92
      %p101 = scmp.eq.s32.totalorder %s32, 0
      %p102 = por %p100, %p101
      %p103 = scmp.ne.s32.totalorder %s91, %s92
      %p104 = scmp.eq.s32.totalorder %s33, 1
      %p105 = por %p103, %p104
      %p107 = scmp.ne.s32.totalorder %s92, %s106
      %p108 = scmp.eq.s32.totalorder %s33, 0
      %p109 = por %p107, %p108
      %s111 = sadd.s32 %s110, 1
      %p114 = scmp.eq.s32.totalorder %s27, 1
      %p115 = scmp.ne.s32.totalorder %s110, %s112
      %p116 = scmp.eq.s32.totalorder %s27, 0
      %p117 = por %p115, %p116
      %p118 = scmp.ne.s32.totalorder %s110, %s112
      %p119 = scmp.eq.s32.totalorder %s32, 1
      %p120 = por %p118, %p119
      %p121 = scmp.ne.s32.totalorder %s112, %s113
      %p122 = scmp.eq.s32.totalorder %s32, 0
      %p123 = por %p121, %p122
      %p124 = scmp.ne.s32.totalorder %s112, %s113
      %p125 = scmp.eq.s32.totalorder %s33, 1
      %p126 = por %p124, %p125
      %p128 = scmp.ne.s32.totalorder %s113, %s127
      %p129 = scmp.eq.s32.totalorder %s33, 0
      %p130 = por %p128, %p129
      %s131 = ssub.s32 %s34, %s46
      %s132 = ssub.s32 %s35, %s42
      %s133 = sor.u32 %s131, %s132
      %p134 = scmp.eq.s32.totalorder %s133, 0
      %s136 = sadd.s32 %s135, 1
      %s137 = scalar_select %p134, %s135, %s136
      %p140 = pneg %p134
      %p141 = scmp.eq.s32.totalorder %s27, 1
      %p142 = por %p140, %p141
      %p143 = scmp.ne.s32.totalorder %s135, %s138
      %p144 = scmp.eq.s32.totalorder %s27, 0
      %p145 = por %p143, %p144
      %p146 = scmp.ne.s32.totalorder %s135, %s138
      %p147 = scmp.eq.s32.totalorder %s32, 1
      %p148 = por %p146, %p147
      %p149 = scmp.ne.s32.totalorder %s138, %s139
      %p150 = scmp.eq.s32.totalorder %s32, 0
      %p151 = por %p149, %p150
      %p152 = scmp.ne.s32.totalorder %s138, %s139
      %p153 = scmp.eq.s32.totalorder %s33, 1
      %p154 = por %p152, %p153
      %p156 = scmp.ne.s32.totalorder %s139, %s155
      %p157 = scmp.eq.s32.totalorder %s33, 0
      %p158 = por %p156, %p157
      %s159 = ssub.s32 %s34, %s46
      %s160 = ssub.s32 %s35, %s42
      %s161 = sor.u32 %s159, %s160
      %p162 = scmp.eq.s32.totalorder %s161, 0
      %s164 = sadd.s32 %s163, 1
      %s165 = scalar_select %p162, %s163, %s164
      %p168 = pneg %p162
      %p169 = scmp.eq.s32.totalorder %s27, 1
      %p170 = por %p168, %p169
      %p171 = scmp.ne.s32.totalorder %s163, %s166
      %p172 = scmp.eq.s32.totalorder %s27, 0
      %p173 = por %p171, %p172
      %p174 = scmp.ne.s32.totalorder %s163, %s166
      %p175 = scmp.eq.s32.totalorder %s32, 1
      %p176 = por %p174, %p175
      %p177 = scmp.ne.s32.totalorder %s166, %s167
      %p178 = scmp.eq.s32.totalorder %s32, 0
      %p179 = por %p177, %p178
      %p180 = scmp.ne.s32.totalorder %s166, %s167
      %p181 = scmp.eq.s32.totalorder %s33, 1
      %p182 = por %p180, %p181
      %p184 = scmp.ne.s32.totalorder %s167, %s183
      %p185 = scmp.eq.s32.totalorder %s33, 0
      %p186 = por %p184, %p185
      %s187 = ssub.s32 %s34, %s46
      %s188 = ssub.s32 %s35, %s42
      %s189 = sor.u32 %s187, %s188
      %p190 = scmp.eq.s32.totalorder %s189, 0
      %s192 = sadd.s32 %s191, 1
      %s193 = scalar_select %p190, %s191, %s192
      %p196 = pneg %p190
      %p197 = scmp.eq.s32.totalorder %s27, 1
      %p198 = por %p196, %p197
      %p199 = scmp.ne.s32.totalorder %s191, %s194
      %p200 = scmp.eq.s32.totalorder %s27, 0
      %p201 = por %p199, %p200
      %p202 = scmp.ne.s32.totalorder %s191, %s194
      %p203 = scmp.eq.s32.totalorder %s32, 1
      %p204 = por %p202, %p203
      %p205 = scmp.ne.s32.totalorder %s194, %s195
      %p206 = scmp.eq.s32.totalorder %s32, 0
      %p207 = por %p205, %p206
      %p208 = scmp.ne.s32.totalorder %s194, %s195
      %p209 = scmp.eq.s32.totalorder %s33, 1
      %p210 = por %p208, %p209
      %p212 = scmp.ne.s32.totalorder %s195, %s211
      %p213 = scmp.eq.s32.totalorder %s33, 0
      %p214 = por %p212, %p213
      %s215 = ssub.s32 %s34, %s46
      %s216 = ssub.s32 %s35, %s42
      %s217 = sor.u32 %s215, %s216
      %p218 = scmp.eq.s32.totalorder %s217, 0
      %s220 = sadd.s32 %s219, 1
      %s221 = scalar_select %p218, %s219, %s220
      %p224 = pneg %p218
      %p225 = scmp.eq.s32.totalorder %s27, 1
      %p226 = por %p224, %p225
      %p227 = scmp.ne.s32.totalorder %s219, %s222
      %p228 = scmp.eq.s32.totalorder %s27, 0
      %p229 = por %p227, %p228
      %p230 = scmp.ne.s32.totalorder %s219, %s222
      %p231 = scmp.eq.s32.totalorder %s32, 1
      %p232 = por %p230, %p231
      %p233 = scmp.ne.s32.totalorder %s222, %s223
      %p234 = scmp.eq.s32.totalorder %s32, 0
      %p235 = por %p233, %p234
      %p236 = scmp.ne.s32.totalorder %s222, %s223
      %p237 = scmp.eq.s32.totalorder %s33, 1
      %p238 = por %p236, %p237
      %p240 = scmp.ne.s32.totalorder %s223, %s239
      %p241 = scmp.eq.s32.totalorder %s33, 0
      %p242 = por %p240, %p241
      %s243 = ssub.s32 %s34, %s46
      %s244 = ssub.s32 %s35, %s42
      %s245 = sor.u32 %s243, %s244
      %p246 = scmp.eq.s32.totalorder %s245, 0
      %s248 = sadd.s32 %s247, 1
      %s249 = scalar_select %p246, %s247, %s248
      %p252 = pneg %p246
      %p253 = scmp.eq.s32.totalorder %s27, 1
      %p254 = por %p252, %p253
      %p255 = scmp.ne.s32.totalorder %s247, %s250
      %p256 = scmp.eq.s32.totalorder %s27, 0
      %p257 = por %p255, %p256
      %p258 = scmp.ne.s32.totalorder %s247, %s250
      %p259 = scmp.eq.s32.totalorder %s32, 1
      %p260 = por %p258, %p259
      %p261 = scmp.ne.s32.totalorder %s250, %s251
      %p262 = scmp.eq.s32.totalorder %s32, 0
      %p263 = por %p261, %p262
      %p264 = scmp.ne.s32.totalorder %s250, %s251
      %p265 = scmp.eq.s32.totalorder %s33, 1
      %p266 = por %p264, %p265
      %p268 = scmp.ne.s32.totalorder %s251, %s267
      %p269 = scmp.eq.s32.totalorder %s33, 0
      %p270 = por %p268, %p269
      %p271 = scmp.le.s32.totalorder 1, %s27
      %p272 = scmp.lt.s32.totalorder %s27, 3
      %p273 = pnand %p271, %p272
      %p274 = pneg %p273
      // Predicated region
      $region9: #{tpu_custom_call.1} parent=5 // pred_check
        _
      $region10: #{tpu_custom_call.1} parent=5 // pred_check_branch
        %276 = sbr.rel (%p273) target = $region12
      $region11: #{tpu_custom_call.1} parent=5 // pred_region
        %s277 = ssub.s32 %s27, 1
        // Predicated region
        $region13: #{tpu_custom_call.1} parent=11 // pred_check
          %p278 = pneg %p60
        $region14: #{tpu_custom_call.1} parent=11 // pred_check_branch
          %280 = sbr.rel (%p278) target = $region16
        $region15: #{tpu_custom_call.1} parent=11 // pred_region
          %282 = vsyncadd [#allocation3], 0
          %s283 = sshll.u32 %s0, 4
          %s284 = int_to_ptr.hbm [resolvable:$true] %s283
          %s285 = sshll.u32 [#allocation2], 4
          %s286 = int_to_ptr.vmem [resolvable:$true] %s285
          %291 = dma.hbm_to_vmem [thread:$0]  %s284, 512, %s286, [#allocation3], 128, 128, 8
        $region16: #{tpu_custom_call.1} parent=11 // pred_fallthru
          _
        // Predicated region
        $region17: #{tpu_custom_call.1} parent=11 // pred_check
          %p292 = pneg %p81
        $region18: #{tpu_custom_call.1} parent=11 // pred_check_branch
          %294 = sbr.rel (%p292) target = $region20
        $region19: #{tpu_custom_call.1} parent=11 // pred_region
          %296 = vsyncadd [#allocation6], 0
          %s297 = sshll.u32 %s1, 4
          %s298 = int_to_ptr.hbm [resolvable:$true] %s297
          %s299 = sshll.u32 [#allocation5], 4
          %s300 = int_to_ptr.vmem [resolvable:$true] %s299
          %305 = dma.hbm_to_vmem [thread:$0]  %s298, 512, %s300, [#allocation6], 128, 128, 8
        $region20: #{tpu_custom_call.1} parent=11 // pred_fallthru
          _
        // Predicated region
        $region21: #{tpu_custom_call.1} parent=11 // pred_check
          %p306 = pneg %p102
        $region22: #{tpu_custom_call.1} parent=11 // pred_check_branch
          %308 = sbr.rel (%p306) target = $region24
        $region23: #{tpu_custom_call.1} parent=11 // pred_region
          %310 = vsyncadd [#allocation6], 0
          %s311 = sshll.u32 %s2, 4
          %s312 = int_to_ptr.hbm [resolvable:$true] %s311
          %s313 = sshll.u32 [#allocation7], 4
          %s314 = int_to_ptr.vmem [resolvable:$true] %s313
          %319 = dma.hbm_to_vmem [thread:$0]  %s312, 512, %s314, [#allocation6], 128, 128, 8
        $region24: #{tpu_custom_call.1} parent=11 // pred_fallthru
          _
        // Predicated region
        $region25: #{tpu_custom_call.1} parent=11 // pred_check
          %p320 = pneg %p123
        $region26: #{tpu_custom_call.1} parent=11 // pred_check_branch
          %322 = sbr.rel (%p320) target = $region28
        $region27: #{tpu_custom_call.1} parent=11 // pred_region
          %324 = vsyncadd [#allocation9], 0
          %s325 = sshll.u32 %s3, 4
          %s326 = int_to_ptr.hbm [resolvable:$true] %s325
          %s327 = sshll.u32 [#allocation8], 4
          %s328 = int_to_ptr.vmem [resolvable:$true] %s327
          %333 = dma.hbm_to_vmem [thread:$0]  %s326, 512, %s328, [#allocation9], 128, 128, 8
        $region28: #{tpu_custom_call.1} parent=11 // pred_fallthru
          _
      $region12: #{tpu_custom_call.1} parent=5 // pred_fallthru
        _
      %p334 = scmp.lt.s32.totalorder %s27, 2
      // Predicated region
      $region29: #{tpu_custom_call.1} parent=5 // pred_check
        %p335 = pneg %p334
      $region30: #{tpu_custom_call.1} parent=5 // pred_check_branch
        %337 = sbr.rel (%p335) target = $region32
      $region31: #{tpu_custom_call.1} parent=5 // pred_region
        // Predicated region
        $region33: #{tpu_custom_call.1} parent=31 // pred_check
          %p338 = pneg %p145
        $region34: #{tpu_custom_call.1} parent=31 // pred_check_branch
          %340 = sbr.rel (%p338) target = $region36
        $region35: #{tpu_custom_call.1} parent=31 // pred_region
          %s341 = sand.u32 %s27, 1
          %s342 = scalar_lea.sflag [#allocation3], %s341
          %s343 = sand.u32 %s135, 1
          %s344 = smul.addr %s343, 96
          %s345 = scalar_lea.vmem [#allocation10], %s344
          %s346 = smul.u32 6, %s35
          %348 = vsyncadd %s342, 0
          %s349 = smul.addr %s346, 2
          %s350 = smul.addr %s34, 12
          %s351 = sadd.s32 %s349, %s350
          %s352 = smul.addr %s351, 8
          %s353 = scalar_lea.hbm %s4, %s352
          %s354 = sshll.u32 %s353, 4
          %s355 = int_to_ptr.hbm [resolvable:$true] %s354
          %s356 = sshll.u32 %s345, 4
          %s357 = int_to_ptr.vmem [resolvable:$true] %s356
          %362 = dma.hbm_to_vmem [thread:$0]  %s355, 1536, %s357, %s342, 128, 128, 8
        $region36: #{tpu_custom_call.1} parent=31 // pred_fallthru
          _
      $region32: #{tpu_custom_call.1} parent=5 // pred_fallthru
        _
      %p363 = scmp.le.s32.totalorder 1, %s27
      %p364 = scmp.lt.s32.totalorder %s27, 3
      %p365 = pnand %p363, %p364
      %p366 = pneg %p365
      // Predicated region
      $region37: #{tpu_custom_call.1} parent=5 // pred_check
        _
      $region38: #{tpu_custom_call.1} parent=5 // pred_check_branch
        %368 = sbr.rel (%p365) target = $region40
      $region39: #{tpu_custom_call.1} parent=5 // pred_region
        %s369 = ssub.s32 %s27, 1
        // Predicated region
        $region41: #{tpu_custom_call.1} parent=39 // pred_check
          %p370 = pneg %p60
        $region42: #{tpu_custom_call.1} parent=39 // pred_check_branch
          %372 = sbr.rel (%p370) target = $region44
        $region43: #{tpu_custom_call.1} parent=39 // pred_region
          %374 = dma.done [#allocation3], 512
        $region44: #{tpu_custom_call.1} parent=39 // pred_fallthru
          _
        // Predicated region
        $region45: #{tpu_custom_call.1} parent=39 // pred_check
          %p375 = pneg %p81
        $region46: #{tpu_custom_call.1} parent=39 // pred_check_branch
          %377 = sbr.rel (%p375) target = $region48
        $region47: #{tpu_custom_call.1} parent=39 // pred_region
          %379 = dma.done [#allocation6], 512
        $region48: #{tpu_custom_call.1} parent=39 // pred_fallthru
          _
        // Predicated region
        $region49: #{tpu_custom_call.1} parent=39 // pred_check
          %p380 = pneg %p102
        $region50: #{tpu_custom_call.1} parent=39 // pred_check_branch
          %382 = sbr.rel (%p380) target = $region52
        $region51: #{tpu_custom_call.1} parent=39 // pred_region
          %384 = dma.done [#allocation6], 512
        $region52: #{tpu_custom_call.1} parent=39 // pred_fallthru
          _
        // Predicated region
        $region53: #{tpu_custom_call.1} parent=39 // pred_check
          %p385 = pneg %p123
        $region54: #{tpu_custom_call.1} parent=39 // pred_check_branch
          %387 = sbr.rel (%p385) target = $region56
        $region55: #{tpu_custom_call.1} parent=39 // pred_region
          %389 = dma.done [#allocation9], 512
        $region56: #{tpu_custom_call.1} parent=39 // pred_fallthru
          _
        %s390 = sand.u32 %s32, 1
        %s391 = scalar_lea.sflag [#allocation3], %s390
        %s392 = sand.u32 %s138, 1
        %s393 = smul.addr %s392, 96
        %s394 = scalar_lea.vmem [#allocation10], %s393
        // Predicated region
        $region57: #{tpu_custom_call.1} parent=39 // pred_check
          %p395 = pneg %p151
        $region58: #{tpu_custom_call.1} parent=39 // pred_check_branch
          %397 = sbr.rel (%p395) target = $region60
        $region59: #{tpu_custom_call.1} parent=39 // pred_region
          %399 = dma.done %s391, 1536
        $region60: #{tpu_custom_call.1} parent=39 // pred_fallthru
          _
        %p400 = pneg %p60
        %p401 = pneg %p57
        %p402 = pneg %p81
        %p403 = pneg %p78
        %p404 = pneg %p102
        %p405 = pneg %p99
        %p406 = pneg %p123
        %p407 = pneg %p120
        %s408 = sand.u32 %s32, 1
        %s409 = scalar_lea.sflag [#allocation3], %s408
        %s410 = sand.u32 %s138, 1
        %s411 = smul.addr %s410, 96
        %s412 = scalar_lea.vmem [#allocation10], %s411
        %p413 = pneg %p151
        %p414 = pneg %p148
        %p415 = pneg %p179
        %p416 = pneg %p176
        %s417 = sand.u32 %s166, 1
        %s418 = scalar_lea.sflag [#allocation4], %s417
        %s419 = sand.u32 %s166, 1
        %s420 = smul.addr %s419, 96
        %s421 = scalar_lea.vmem [#allocation11], %s420
        %p422 = pneg %p207
        %p423 = pneg %p204
        %s424 = sand.u32 %s32, 1
        %s425 = scalar_lea.sflag [#allocation13], %s424
        %s426 = sand.u32 %s194, 1
        %s427 = smul.addr %s426, 96
        %s428 = scalar_lea.vmem [#allocation12], %s427
        %p429 = pneg %p235
        %p430 = pneg %p232
        %s431 = sand.u32 %s32, 1
        %s432 = scalar_lea.sflag [#allocation13], %s431
        %s433 = sand.u32 %s222, 1
        %s434 = smul.addr %s433, 96
        %s435 = scalar_lea.vmem [#allocation14], %s434
        %p436 = pneg %p263
        %p437 = pneg %p260
        %s438 = sand.u32 %s250, 1
        %s439 = scalar_lea.sflag [#allocation16], %s438
        %s440 = sand.u32 %s250, 1
        %s441 = smul.addr %s440, 96
        %s442 = scalar_lea.vmem [#allocation15], %s441
        %s443 = smul.u32 6, %s37
        %s444 = smul.u32 6, %s37
        %s445 = smul.u32 6, %s37
        %s446 = smul.u32 6, %s37
        %s447 = smul.u32 6, %s37
        %v448 = vlaneseq
        %v449 = vshrl.u32 %v448, 7
        %v450 = vadd.s32 %v449, 8
        %vm451 = vcmp.ge.s32.totalorder %v449, 1
        %vm452 = vcmp.ge.s32.totalorder %v450, 1
        %vm453 = vcmp.lt.s32.totalorder %v449, 5
        %vm454 = vcmp.lt.s32.totalorder %v450, 5
        %vm455 = vmand %vm451, %vm453
        %vm456 = vmand %vm452, %vm454
        %s457 = smul.u32 %s36, 16
        %s458 = scalar_lea.vmem [#allocation2], %s457
        %v459 = vld [vmem:[%s458] sm:$0xff]
        %v460 = vld [vmem:[%s458 + $0x8] sm:$0xff]
        %v461 = vld [vmem:[%s394] sm:$0xff]
        %v462 = vld [vmem:[%s394 + $0x8] sm:$0xff]
        %v463 = vld [vmem:[%s394 + $0x10] sm:$0xff]
        %v464 = vld [vmem:[%s394 + $0x18] sm:$0xff]
        %v465 = vld [vmem:[%s394 + $0x20] sm:$0xff]
        %v466 = vld [vmem:[%s394 + $0x28] sm:$0xff]
        %v467 = vld [vmem:[%s394 + $0x30] sm:$0xff]
        %v468 = vld [vmem:[%s394 + $0x38] sm:$0xff]
        %v469 = vld [vmem:[%s394 + $0x40] sm:$0xff]
        %v470 = vld [vmem:[%s394 + $0x48] sm:$0xff]
        %v471 = vld [vmem:[%s394 + $0x50] sm:$0xff]
        %v472 = vld [vmem:[%s394 + $0x58] sm:$0xff]
        %v473 = vsel %vm455, 1, 0
        %v474 = vsel %vm456, 1, 0
        %vm475 = vcmp.eq.s32.totalorder %v473, 1
        %vm476 = vcmp.eq.s32.totalorder %v474, 1
        %v477 = vsel %vm475, %v459, %v461
        %v478 = vsel %vm476, %v460, %v462
        %v479 = vsel %vm475, %v459, %v463
        %v480 = vsel %vm476, %v460, %v464
        %v481 = vsel %vm475, %v459, %v465
        %v482 = vsel %vm476, %v460, %v466
        %v483 = vsel %vm475, %v459, %v467
        %v484 = vsel %vm476, %v460, %v468
        %v485 = vsel %vm475, %v459, %v469
        %v486 = vsel %vm476, %v460, %v470
        %v487 = vsel %vm475, %v459, %v471
        %v488 = vsel %vm476, %v460, %v472
        %489 = vst [vmem:[%s421] sm:$0xff] %v477
        %490 = vst [vmem:[%s421 + $0x8] sm:$0xff] %v478
        %491 = vst [vmem:[%s421 + $0x10] sm:$0xff] %v479
        %492 = vst [vmem:[%s421 + $0x18] sm:$0xff] %v480
        %493 = vst [vmem:[%s421 + $0x20] sm:$0xff] %v481
        %494 = vst [vmem:[%s421 + $0x28] sm:$0xff] %v482
        %495 = vst [vmem:[%s421 + $0x30] sm:$0xff] %v483
        %496 = vst [vmem:[%s421 + $0x38] sm:$0xff] %v484
        %497 = vst [vmem:[%s421 + $0x40] sm:$0xff] %v485
        %498 = vst [vmem:[%s421 + $0x48] sm:$0xff] %v486
        %499 = vst [vmem:[%s421 + $0x50] sm:$0xff] %v487
        %500 = vst [vmem:[%s421 + $0x58] sm:$0xff] %v488
        %s501 = scalar_lea.vmem [#allocation5], %s457
        %v502 = vld [vmem:[%s501] sm:$0xff]
        %v503 = vld [vmem:[%s501 + $0x8] sm:$0xff]
        %v504 = vld [vmem:[%s394] sm:$0xff]
        %v505 = vld [vmem:[%s394 + $0x8] sm:$0xff]
        %v506 = vld [vmem:[%s394 + $0x10] sm:$0xff]
        %v507 = vld [vmem:[%s394 + $0x18] sm:$0xff]
        %v508 = vld [vmem:[%s394 + $0x20] sm:$0xff]
        %v509 = vld [vmem:[%s394 + $0x28] sm:$0xff]
        %v510 = vld [vmem:[%s394 + $0x30] sm:$0xff]
        %v511 = vld [vmem:[%s394 + $0x38] sm:$0xff]
        %v512 = vld [vmem:[%s394 + $0x40] sm:$0xff]
        %v513 = vld [vmem:[%s394 + $0x48] sm:$0xff]
        %v514 = vld [vmem:[%s394 + $0x50] sm:$0xff]
        %v515 = vld [vmem:[%s394 + $0x58] sm:$0xff]
        %v516 = vsel %vm475, %v502, %v504
        %v517 = vsel %vm476, %v503, %v505
        %v518 = vsel %vm475, %v502, %v506
        %v519 = vsel %vm476, %v503, %v507
        %v520 = vsel %vm475, %v502, %v508
        %v521 = vsel %vm476, %v503, %v509
        %v522 = vsel %vm475, %v502, %v510
        %v523 = vsel %vm476, %v503, %v511
        %v524 = vsel %vm475, %v502, %v512
        %v525 = vsel %vm476, %v503, %v513
        %v526 = vsel %vm475, %v502, %v514
        %v527 = vsel %vm476, %v503, %v515
        %528 = vst [vmem:[%s428] sm:$0xff] %v516
        %529 = vst [vmem:[%s428 + $0x8] sm:$0xff] %v517
        %530 = vst [vmem:[%s428 + $0x10] sm:$0xff] %v518
        %531 = vst [vmem:[%s428 + $0x18] sm:$0xff] %v519
        %532 = vst [vmem:[%s428 + $0x20] sm:$0xff] %v520
        %533 = vst [vmem:[%s428 + $0x28] sm:$0xff] %v521
        %534 = vst [vmem:[%s428 + $0x30] sm:$0xff] %v522
        %535 = vst [vmem:[%s428 + $0x38] sm:$0xff] %v523
        %536 = vst [vmem:[%s428 + $0x40] sm:$0xff] %v524
        %537 = vst [vmem:[%s428 + $0x48] sm:$0xff] %v525
        %538 = vst [vmem:[%s428 + $0x50] sm:$0xff] %v526
        %539 = vst [vmem:[%s428 + $0x58] sm:$0xff] %v527
        %s540 = scalar_lea.vmem [#allocation7], %s457
        %v541 = vld [vmem:[%s540] sm:$0xff]
        %v542 = vld [vmem:[%s540 + $0x8] sm:$0xff]
        %v543 = vld [vmem:[%s394] sm:$0xff]
        %v544 = vld [vmem:[%s394 + $0x8] sm:$0xff]
        %v545 = vld [vmem:[%s394 + $0x10] sm:$0xff]
        %v546 = vld [vmem:[%s394 + $0x18] sm:$0xff]
        %v547 = vld [vmem:[%s394 + $0x20] sm:$0xff]
        %v548 = vld [vmem:[%s394 + $0x28] sm:$0xff]
        %v549 = vld [vmem:[%s394 + $0x30] sm:$0xff]
        %v550 = vld [vmem:[%s394 + $0x38] sm:$0xff]
        %v551 = vld [vmem:[%s394 + $0x40] sm:$0xff]
        %v552 = vld [vmem:[%s394 + $0x48] sm:$0xff]
        %v553 = vld [vmem:[%s394 + $0x50] sm:$0xff]
        %v554 = vld [vmem:[%s394 + $0x58] sm:$0xff]
        %v555 = vsel %vm475, %v541, %v543
        %v556 = vsel %vm476, %v542, %v544
        %v557 = vsel %vm475, %v541, %v545
        %v558 = vsel %vm476, %v542, %v546
        %v559 = vsel %vm475, %v541, %v547
        %v560 = vsel %vm476, %v542, %v548
        %v561 = vsel %vm475, %v541, %v549
        %v562 = vsel %vm476, %v542, %v550
        %v563 = vsel %vm475, %v541, %v551
        %v564 = vsel %vm476, %v542, %v552
        %v565 = vsel %vm475, %v541, %v553
        %v566 = vsel %vm476, %v542, %v554
        %567 = vst [vmem:[%s435] sm:$0xff] %v555
        %568 = vst [vmem:[%s435 + $0x8] sm:$0xff] %v556
        %569 = vst [vmem:[%s435 + $0x10] sm:$0xff] %v557
        %570 = vst [vmem:[%s435 + $0x18] sm:$0xff] %v558
        %571 = vst [vmem:[%s435 + $0x20] sm:$0xff] %v559
        %572 = vst [vmem:[%s435 + $0x28] sm:$0xff] %v560
        %573 = vst [vmem:[%s435 + $0x30] sm:$0xff] %v561
        %574 = vst [vmem:[%s435 + $0x38] sm:$0xff] %v562
        %575 = vst [vmem:[%s435 + $0x40] sm:$0xff] %v563
        %576 = vst [vmem:[%s435 + $0x48] sm:$0xff] %v564
        %577 = vst [vmem:[%s435 + $0x50] sm:$0xff] %v565
        %578 = vst [vmem:[%s435 + $0x58] sm:$0xff] %v566
        %s579 = scalar_lea.vmem [#allocation8], %s457
        %v580 = vld [vmem:[%s579] sm:$0xff]
        %v581 = vld [vmem:[%s579 + $0x8] sm:$0xff]
        %v582 = vld [vmem:[%s394] sm:$0xff]
        %v583 = vld [vmem:[%s394 + $0x8] sm:$0xff]
        %v584 = vld [vmem:[%s394 + $0x10] sm:$0xff]
        %v585 = vld [vmem:[%s394 + $0x18] sm:$0xff]
        %v586 = vld [vmem:[%s394 + $0x20] sm:$0xff]
        %v587 = vld [vmem:[%s394 + $0x28] sm:$0xff]
        %v588 = vld [vmem:[%s394 + $0x30] sm:$0xff]
        %v589 = vld [vmem:[%s394 + $0x38] sm:$0xff]
        %v590 = vld [vmem:[%s394 + $0x40] sm:$0xff]
        %v591 = vld [vmem:[%s394 + $0x48] sm:$0xff]
        %v592 = vld [vmem:[%s394 + $0x50] sm:$0xff]
        %v593 = vld [vmem:[%s394 + $0x58] sm:$0xff]
        %v594 = vsel %vm475, %v580, %v582
        %v595 = vsel %vm476, %v581, %v583
        %v596 = vsel %vm475, %v580, %v584
        %v597 = vsel %vm476, %v581, %v585
        %v598 = vsel %vm475, %v580, %v586
        %v599 = vsel %vm476, %v581, %v587
        %v600 = vsel %vm475, %v580, %v588
        %v601 = vsel %vm476, %v581, %v589
        %v602 = vsel %vm475, %v580, %v590
        %v603 = vsel %vm476, %v581, %v591
        %v604 = vsel %vm475, %v580, %v592
        %v605 = vsel %vm476, %v581, %v593
        %606 = vst [vmem:[%s442] sm:$0xff] %v594
        %607 = vst [vmem:[%s442 + $0x8] sm:$0xff] %v595
        %608 = vst [vmem:[%s442 + $0x10] sm:$0xff] %v596
        %609 = vst [vmem:[%s442 + $0x18] sm:$0xff] %v597
        %610 = vst [vmem:[%s442 + $0x20] sm:$0xff] %v598
        %611 = vst [vmem:[%s442 + $0x28] sm:$0xff] %v599
        %612 = vst [vmem:[%s442 + $0x30] sm:$0xff] %v600
        %613 = vst [vmem:[%s442 + $0x38] sm:$0xff] %v601
        %614 = vst [vmem:[%s442 + $0x40] sm:$0xff] %v602
        %615 = vst [vmem:[%s442 + $0x48] sm:$0xff] %v603
        %616 = vst [vmem:[%s442 + $0x50] sm:$0xff] %v604
        %617 = vst [vmem:[%s442 + $0x58] sm:$0xff] %v605
        %s618 = sand.u32 %s166, 1
        %s619 = scalar_lea.sflag [#allocation4], %s618
        %s620 = sand.u32 %s166, 1
        %s621 = smul.addr %s620, 96
        %s622 = scalar_lea.vmem [#allocation11], %s621
        %s623 = sand.u32 %s32, 1
        %s624 = scalar_lea.sflag [#allocation13], %s623
        %s625 = sand.u32 %s194, 1
        %s626 = smul.addr %s625, 96
        %s627 = scalar_lea.vmem [#allocation12], %s626
        %s628 = sand.u32 %s32, 1
        %s629 = scalar_lea.sflag [#allocation13], %s628
        %s630 = sand.u32 %s222, 1
        %s631 = smul.addr %s630, 96
        %s632 = scalar_lea.vmem [#allocation14], %s631
        %s633 = sand.u32 %s250, 1
        %s634 = scalar_lea.sflag [#allocation16], %s633
        %s635 = sand.u32 %s250, 1
        %s636 = smul.addr %s635, 96
        %s637 = scalar_lea.vmem [#allocation15], %s636
        // Predicated region
        $region61: #{tpu_custom_call.1} parent=39 // pred_check
          %p638 = pneg %p176
        $region62: #{tpu_custom_call.1} parent=39 // pred_check_branch
          %640 = sbr.rel (%p638) target = $region64
        $region63: #{tpu_custom_call.1} parent=39 // pred_region
          %s641 = smul.u32 6, %s37
          %643 = vsyncadd %s619, 0
          %s644 = smul.addr %s641, 2
          %s645 = smul.addr %s36, 12
          %s646 = sadd.s32 %s644, %s645
          %s647 = smul.addr %s646, 8
          %s648 = scalar_lea.hbm %s5, %s647
          %s649 = sshll.u32 %s622, 4
          %s650 = int_to_ptr.vmem [resolvable:$true] %s649
          %s651 = sshll.u32 %s648, 4
          %s652 = int_to_ptr.hbm [resolvable:$true] %s651
          %657 = dma.vmem_to_hbm [thread:$0]  %s650, 1536, %s652, %s619, 128, 128, 8
        $region64: #{tpu_custom_call.1} parent=39 // pred_fallthru
          _
        // Predicated region
        $region65: #{tpu_custom_call.1} parent=39 // pred_check
          %p658 = pneg %p204
        $region66: #{tpu_custom_call.1} parent=39 // pred_check_branch
          %660 = sbr.rel (%p658) target = $region68
        $region67: #{tpu_custom_call.1} parent=39 // pred_region
          %s661 = smul.u32 6, %s37
          %663 = vsyncadd %s624, 0
          %s664 = smul.addr %s661, 2
          %s665 = smul.addr %s36, 12
          %s666 = sadd.s32 %s664, %s665
          %s667 = smul.addr %s666, 8
          %s668 = scalar_lea.hbm %s6, %s667
          %s669 = sshll.u32 %s627, 4
          %s670 = int_to_ptr.vmem [resolvable:$true] %s669
          %s671 = sshll.u32 %s668, 4
          %s672 = int_to_ptr.hbm [resolvable:$true] %s671
          %677 = dma.vmem_to_hbm [thread:$0]  %s670, 1536, %s672, %s624, 128, 128, 8
        $region68: #{tpu_custom_call.1} parent=39 // pred_fallthru
          _
        // Predicated region
        $region69: #{tpu_custom_call.1} parent=39 // pred_check
          %p678 = pneg %p232
        $region70: #{tpu_custom_call.1} parent=39 // pred_check_branch
          %680 = sbr.rel (%p678) target = $region72
        $region71: #{tpu_custom_call.1} parent=39 // pred_region
          %s681 = smul.u32 6, %s37
          %683 = vsyncadd %s629, 0
          %s684 = smul.addr %s681, 2
          %s685 = smul.addr %s36, 12
          %s686 = sadd.s32 %s684, %s685
          %s687 = smul.addr %s686, 8
          %s688 = scalar_lea.hbm %s7, %s687
          %s689 = sshll.u32 %s632, 4
          %s690 = int_to_ptr.vmem [resolvable:$true] %s689
          %s691 = sshll.u32 %s688, 4
          %s692 = int_to_ptr.hbm [resolvable:$true] %s691
          %697 = dma.vmem_to_hbm [thread:$0]  %s690, 1536, %s692, %s629, 128, 128, 8
        $region72: #{tpu_custom_call.1} parent=39 // pred_fallthru
          _
        // Predicated region
        $region73: #{tpu_custom_call.1} parent=39 // pred_check
          %p698 = pneg %p260
        $region74: #{tpu_custom_call.1} parent=39 // pred_check_branch
          %700 = sbr.rel (%p698) target = $region76
        $region75: #{tpu_custom_call.1} parent=39 // pred_region
          %s701 = smul.u32 6, %s37
          %703 = vsyncadd %s634, 0
          %s704 = smul.addr %s701, 2
          %s705 = smul.addr %s36, 12
          %s706 = sadd.s32 %s704, %s705
          %s707 = smul.addr %s706, 8
          %s708 = scalar_lea.hbm %s8, %s707
          %s709 = sshll.u32 %s637, 4
          %s710 = int_to_ptr.vmem [resolvable:$true] %s709
          %s711 = sshll.u32 %s708, 4
          %s712 = int_to_ptr.hbm [resolvable:$true] %s711
          %717 = dma.vmem_to_hbm [thread:$0]  %s710, 1536, %s712, %s634, 128, 128, 8
        $region76: #{tpu_custom_call.1} parent=39 // pred_fallthru
          _
      $region40: #{tpu_custom_call.1} parent=5 // pred_fallthru
        _
      %p718 = scmp.le.s32.totalorder 2, %s27
      // Predicated region
      $region77: #{tpu_custom_call.1} parent=5 // pred_check
        %p719 = pneg %p718
      $region78: #{tpu_custom_call.1} parent=5 // pred_check_branch
        %721 = sbr.rel (%p719) target = $region80
      $region79: #{tpu_custom_call.1} parent=5 // pred_region
        %s722 = ssub.s32 %s27, 2
        // Predicated region
        $region81: #{tpu_custom_call.1} parent=79 // pred_check
          %p723 = pneg %p182
        $region82: #{tpu_custom_call.1} parent=79 // pred_check_branch
          %725 = sbr.rel (%p723) target = $region84
        $region83: #{tpu_custom_call.1} parent=79 // pred_region
          %s726 = sand.u32 %s167, 1
          %s727 = scalar_lea.sflag [#allocation4], %s726
          %s728 = sand.u32 %s167, 1
          %s729 = smul.addr %s728, 96
          %s730 = scalar_lea.vmem [#allocation11], %s729
          %732 = dma.done %s727, 1536
        $region84: #{tpu_custom_call.1} parent=79 // pred_fallthru
          _
        // Predicated region
        $region85: #{tpu_custom_call.1} parent=79 // pred_check
          %p733 = pneg %p210
        $region86: #{tpu_custom_call.1} parent=79 // pred_check_branch
          %735 = sbr.rel (%p733) target = $region88
        $region87: #{tpu_custom_call.1} parent=79 // pred_region
          %s736 = sand.u32 %s33, 1
          %s737 = scalar_lea.sflag [#allocation13], %s736
          %s738 = sand.u32 %s195, 1
          %s739 = smul.addr %s738, 96
          %s740 = scalar_lea.vmem [#allocation12], %s739
          %742 = dma.done %s737, 1536
        $region88: #{tpu_custom_call.1} parent=79 // pred_fallthru
          _
        // Predicated region
        $region89: #{tpu_custom_call.1} parent=79 // pred_check
          %p743 = pneg %p238
        $region90: #{tpu_custom_call.1} parent=79 // pred_check_branch
          %745 = sbr.rel (%p743) target = $region92
        $region91: #{tpu_custom_call.1} parent=79 // pred_region
          %s746 = sand.u32 %s33, 1
          %s747 = scalar_lea.sflag [#allocation13], %s746
          %s748 = sand.u32 %s223, 1
          %s749 = smul.addr %s748, 96
          %s750 = scalar_lea.vmem [#allocation14], %s749
          %752 = dma.done %s747, 1536
        $region92: #{tpu_custom_call.1} parent=79 // pred_fallthru
          _
        // Predicated region
        $region93: #{tpu_custom_call.1} parent=79 // pred_check
          %p753 = pneg %p266
        $region94: #{tpu_custom_call.1} parent=79 // pred_check_branch
          %755 = sbr.rel (%p753) target = $region96
        $region95: #{tpu_custom_call.1} parent=79 // pred_region
          %s756 = sand.u32 %s251, 1
          %s757 = scalar_lea.sflag [#allocation16], %s756
          %s758 = sand.u32 %s251, 1
          %s759 = smul.addr %s758, 96
          %s760 = scalar_lea.vmem [#allocation15], %s759
          %762 = dma.done %s757, 1536
        $region96: #{tpu_custom_call.1} parent=79 // pred_fallthru
          _
      $region80: #{tpu_custom_call.1} parent=5 // pred_fallthru
        _
    $region6: #{tpu_custom_call.1} parent=1 // loop_footer
      %s31 = sadd.s32 1, %s27
    $region7: #{tpu_custom_call.1} parent=1 // loop_footer_branch
      %26 = sbr.rel target = $region3
    $region8: #{tpu_custom_call.1} parent=1 // loop_exit
      _
    %763 = vsyncpa [#allocation3], 1
    %s764 = scalar_lea.sflag [#allocation3], 1
    %765 = vsyncpa %s764, 1
    %766 = vsyncpa [#allocation6], 1
    %767 = vsyncpa [#allocation9], 1
    %768 = vsyncpa [#allocation4], 1
    %s769 = scalar_lea.sflag [#allocation4], 1
    %770 = vsyncpa %s769, 1
    %771 = vsyncpa [#allocation13], 1
    %s772 = scalar_lea.sflag [#allocation13], 1
    %773 = vsyncpa %s772, 1
    %774 = vsyncpa [#allocation16], 1
    %s775 = scalar_lea.sflag [#allocation16], 1
    %776 = vsyncpa %s775, 1

</llo_original>
